<compile_context>
chip_gen: v5e
topology: v5e:2x2
jax: 0.10.0
libtpu: 0.0.40
codegen_flags: <defaults>
</compile_context>

<pallas_src>
import math

import jax
import jax.numpy as jnp
from jax.experimental import pallas as pl
from jax.experimental.pallas import tpu as pltpu


# Temporal feature vocab sizes for embed_type='fixed', freq='h'
# (column order of x_mark: ['month', 'day', 'week', 'weekday', 'hour']).
_TEMPORAL_SIZES = (13, 32, 53, 7, 24)
_N_FEAT = len(_TEMPORAL_SIZES)
_K_TOTAL = sum(_TEMPORAL_SIZES)                 # 129
_K_PAD = 256                                    # lane-friendly multi-hot width
_OFFSETS = tuple(sum(_TEMPORAL_SIZES[:i]) for i in range(_N_FEAT))


def sinusoid_table(n, d_model):
    """Fixed sin/cos table used by PositionalEmbedding and FixedEmbedding."""
    position = jnp.arange(n, dtype=jnp.float32)[:, None]
    div_term = jnp.exp(jnp.arange(0, d_model, 2, dtype=jnp.float32)
                       * -(math.log(10000.0) / d_model))
    tab = jnp.zeros((n, d_model), dtype=jnp.float32)
    tab = tab.at[:, 0::2].set(jnp.sin(position * div_term))
    tab = tab.at[:, 1::2].set(jnp.cos(position * div_term))
    return tab


def make_data_embedding_params(conv_w, d_model, max_len=5000):
    """One-time parameter prep (hoisted out of the per-call path).

    conv_w: (d_model, c_in, 3) float32, PyTorch Conv1d weight layout.
    Returns:
      wt:      (3*c_in + 256, d_model) bf16  -- [stacked conv weight ; temporal tables]
      pe:      (max_len, d_model) f32        -- positional sinusoid table
      offsets: (5,) int32                    -- per-feature row offsets into the table
    """
    d_out, c_in, k = conv_w.shape
    assert k == 3 and d_out == d_model
    # Row block k, channel i  ->  w[:, i, k]; with the kernel's [x_{t-1}|x_t|x_{t+1}]
    # feature layout this exactly reproduces the circular-padded k=3 conv.
    w_stack = jnp.transpose(conv_w, (2, 1, 0)).reshape(3 * c_in, d_model)
    # Concatenated fixed temporal tables (month|day|week|weekday|hour), zero-padded
    # to 256 rows (padded rows are never selected by the multi-hot).
    table = jnp.concatenate([sinusoid_table(s, d_model) for s in _TEMPORAL_SIZES],
                            axis=0)
    table = jnp.pad(table, ((0, _K_PAD - _K_TOTAL), (0, 0)))
    wt = jnp.concatenate([w_stack, table], axis=0).astype(jnp.bfloat16)
    pe = sinusoid_table(max_len, d_model)
    offsets = jnp.array(_OFFSETS, dtype=jnp.int32)
    return {"wt": wt, "pe": pe, "offsets": offsets}


def _make_kernel(n_feat, k_pad):
    """Fused TokenEmbedding + TemporalEmbedding + PositionalEmbedding for Bb sequences."""

    def kernel(x_ref, mark_ref, wt_ref, pe_ref, o_ref):
        bb, seq, c = x_ref.shape
        d = pe_ref.shape[1]
        m = bb * seq

        x = x_ref[...]                                              # (bb, L, C) f32
        # Circular time shifts within each sequence (static slices, stay in VMEM).
        x_prev = jnp.concatenate([x[:, seq - 1:, :], x[:, :seq - 1, :]], axis=1)
        x_next = jnp.concatenate([x[:, 1:, :], x[:, :1, :]], axis=1)

        # Multi-hot temporal lookup: offsets are pre-added in the wrapper and the five
        # feature ranges are disjoint, so OR of the compares == sum of one-hots.
        # TODO(synk): out-of-range mark indices silently contribute zero temporal
        #             embedding (PyTorch nn.Embedding would raise).
        idx = mark_ref[...]                                          # (m, n_feat) i32
        col = jax.lax.broadcasted_iota(jnp.int32, (m, k_pad), 1)
        hit = col == idx[:, 0:1]
        for f in range(1, n_feat):
            hit = jnp.logical_or(hit, col == idx[:, f:f + 1])

        # One fused MXU matmul (bf16 operands, f32 accumulation):
        #   value + temporal = [x_{t-1} | x_t | x_{t+1} | multi-hot] @ [W_stack ; table]
        feat = jnp.concatenate(
            [x_prev.reshape(m, c).astype(jnp.bfloat16),
             x.reshape(m, c).astype(jnp.bfloat16),
             x_next.reshape(m, c).astype(jnp.bfloat16),
             hit.astype(jnp.bfloat16)], axis=1)                      # (m, 3C + k_pad)
        vt = jnp.dot(feat, wt_ref[...], preferred_element_type=jnp.float32)

        # + positional embedding, broadcast over the bb sequences of this block.
        pe_b = jnp.broadcast_to(pe_ref[...][None], (bb, seq, d)).reshape(m, d)
        o_ref[...] = vt + pe_b

    return kernel


def _vmem_bytes(bb, seq, c_in, n_feat, d_model, k_pad):
    """Generous per-grid-step VMEM estimate: double-buffered streamed blocks, resident
    params (x2 buffers), and all large intermediates counted as simultaneously live."""
    m = bb * seq
    stream = 2 * m * (c_in * 4 + n_feat * 4 + d_model * 4)            # x / mark / out
    resident = 2 * ((3 * c_in + k_pad) * d_model * 2 + seq * d_model * 4)  # wt bf16, pe f32
    interm = m * (2 * c_in * 4                    # x_prev, x_next (f32)
                  + k_pad * 8                     # iota + boolean mask
                  + (3 * c_in + k_pad) * 2        # feat (bf16)
                  + 3 * d_model * 4)              # matmul result, broadcast pe, sum
    return stream + resident + interm


_VMEM_BUDGET = 40 * 1024 * 1024   # leaves headroom inside v7x's 64 MiB VMEM
_MAX_M_ROWS = 2048                # MXU M-dim is saturated beyond this; stop growing Bb


def _choose_batch_block(B, seq, c_in, n_feat, d_model, k_pad):
    def ok(bb):
        return (B % bb == 0
                and (bb == B or (bb * seq) % 8 == 0)   # sublane-aligned 2-D blocks
                and _vmem_bytes(bb, seq, c_in, n_feat, d_model, k_pad) <= _VMEM_BUDGET)

    best = 1
    for bb in range(1, B + 1):
        if not ok(bb):
            continue
        best = bb
        if bb * seq >= _MAX_M_ROWS:
            break
    if not ok(best):
        best = B    # full-batch block is always shape-legal

    # v7x feeds both TensorCores from the 'parallel' grid axis: prefer >= 2 grid steps
    # when that keeps the matmul M-dim >= 512 rows.  On v5e/v6e (one TC) fewer, larger
    # steps are best, so never trade down below 512 rows.
    if B // best == 1 and B > 1:
        alts = [bb for bb in range(1, B)
                if ok(bb) and B // bb >= 2 and bb * seq >= 512]
        if alts:
            best = max(alts)
    return best


def _data_embedding_forward(x, x_mark, wt, pe, offsets):
    """DataEmbedding.forward(x, x_mark).
    x:       (B, L, c_in) float32
    x_mark:  (B, L, 5) int  -- [month, day, weeknum, weekday, hour] indices
    wt/pe/offsets: from make_data_embedding_params
    returns: (B, L, d_model) float32
    """
    B, seq, c_in = x.shape
    n_feat = offsets.shape[0]
    d_model = wt.shape[1]
    k_pad = wt.shape[0] - 3 * c_in

    # Per-call prep (fuses under jit): pre-offset marks and flatten; slice pe[:L].
    mark = (x_mark.astype(jnp.int32) + offsets[None, None, :]).reshape(B * seq, n_feat)
    pe_l = pe[:seq]

    bb = _choose_batch_block(B, seq, c_in, n_feat, d_model, k_pad)
    grid = (B // bb,)
    need = _vmem_bytes(bb, seq, c_in, n_feat, d_model, k_pad)
    vmem_limit = int(min(48 * 1024 * 1024, max(8 * 1024 * 1024, int(need * 1.3))))

    m_total = B * seq
    flops = 2 * m_total * wt.shape[0] * d_model + m_total * d_model
    bytes_accessed = int(x.size * 4 + mark.size * 4 + wt.size * 2 + pe_l.size * 4
                         + m_total * d_model * 4)

    out2d = pl.pallas_call(
        _make_kernel(n_feat, k_pad),
        grid=grid,
        in_specs=[
            pl.BlockSpec((bb, seq, c_in), lambda g: (g, 0, 0)),       # x, streamed
            pl.BlockSpec((bb * seq, n_feat), lambda g: (g, 0)),       # marks, streamed
            pl.BlockSpec((wt.shape[0], d_model), lambda g: (0, 0)),   # fused weight, resident
            pl.BlockSpec((seq, d_model), lambda g: (0, 0)),           # positional, resident
        ],
        out_specs=pl.BlockSpec((bb * seq, d_model), lambda g: (g, 0)),
        out_shape=jax.ShapeDtypeStruct((m_total, d_model), jnp.float32),
        compiler_params=pltpu.CompilerParams(
            dimension_semantics=("parallel",),
            vmem_limit_bytes=vmem_limit),
        cost_estimate=pl.CostEstimate(flops=int(flops), transcendentals=0,
                                      bytes_accessed=bytes_accessed),
    )(x, mark, wt, pe_l)

    # (B*L, D) -> (B, L, D) is a free row-major metadata reshape.
    return out2d.reshape(B, seq, d_model)


data_embedding_forward = jax.jit(_data_embedding_forward)


def data_embedding_reference(x, x_mark, conv_w, d_model):
    """Independent plain-JAX reference (lax.conv + table gathers).  Operands are rounded
    to bf16 to mirror the kernel's MXU operand precision (accumulation stays f32), so
    the comparison tolerance can stay tight."""
    B, L, _ = x.shape
    xb = x.astype(jnp.bfloat16).astype(jnp.float32)
    wb = conv_w.astype(jnp.bfloat16).astype(jnp.float32)
    xp = jnp.transpose(xb, (0, 2, 1))                                    # (B, C, L)
    xpad = jnp.concatenate([xp[:, :, -1:], xp, xp[:, :, :1]], axis=-1)   # circular pad=1
    y = jax.lax.conv_general_dilated(
        xpad, wb, window_strides=(1,), padding='VALID',
        dimension_numbers=('NCH', 'OIH', 'NCH'),
        precision=jax.lax.Precision.HIGHEST)
    value = jnp.transpose(y, (0, 2, 1))                                  # (B, L, D)
    temporal = jnp.zeros((B, L, d_model), jnp.float32)
    for i, size in enumerate(_TEMPORAL_SIZES):
        tab = sinusoid_table(size, d_model).astype(jnp.bfloat16).astype(jnp.float32)
        temporal = temporal + tab[x_mark[:, :, i]]
    position = sinusoid_table(L, d_model)[None]
    return value + temporal + position


if __name__ == "__main__":
    # Small shapes consistent with the module: ETT-style c_in=7, freq='h' marks.
    B, L, c_in, d_model = 2, 24, 7, 64

    key = jax.random.PRNGKey(0)
    kx, kmark, kw = jax.random.split(key, 3)

    x = jax.random.normal(kx, (B, L, c_in), dtype=jnp.float32)
    sizes = jnp.array(_TEMPORAL_SIZES, dtype=jnp.int32)
    x_mark = jax.random.randint(kmark, (B, L, _N_FEAT), 0, 10 ** 6,
                                dtype=jnp.int32) % sizes

    # Conv1d weight, kaiming_normal_(mode='fan_in', nonlinearity='leaky_relu'), no bias.
    fan_in = c_in * 3
    gain = math.sqrt(2.0 / (1.0 + 0.01 ** 2))
    conv_w = (gain / math.sqrt(fan_in)) * jax.random.normal(
        kw, (d_model, c_in, 3), dtype=jnp.float32)

    params = make_data_embedding_params(conv_w, d_model)
    out = data_embedding_forward(x, x_mark, params["wt"], params["pe"],
                                 params["offsets"])
    out = jax.block_until_ready(out)

    ref = data_embedding_reference(x, x_mark, conv_w, d_model)
    assert out.shape == (B, L, d_model)
    err = float(jnp.max(jnp.abs(out - ref)))
    # Reference mirrors the bf16 operand rounding, so only f32 accumulation-order
    # differences remain.
    assert jnp.allclose(out, ref, atol=5e-3, rtol=5e-3), err
    print("KERNEL_OK")
</pallas_src>

<mosaic_0001>
module attributes {stable_mosaic.version = 11 : i64} {
  func.func @kernel(%arg0: i32, %arg1: memref<2x24x7xf32, #tpu.memory_space<vmem>>, %arg2: memref<48x5xi32, #tpu.memory_space<vmem>>, %arg3: memref<277x64xbf16, #tpu.memory_space<vmem>>, %arg4: memref<24x64xf32, #tpu.memory_space<vmem>>, %arg5: memref<48x64xf32, #tpu.memory_space<vmem>>) attributes {dimension_semantics = [#tpu.dimension_semantics<parallel>], iteration_bounds = array<i64: 1>, scalar_prefetch = 0 : i64, scratch_operands = 0 : i64, tpu.core_type = #tpu.core_type<tc>, window_params = [{transform_indices = @transform_0, window_bounds = array<i64: 2, 24, 7>}, {transform_indices = @transform_1, window_bounds = array<i64: 48, 5>}, {pipeline_mode = #tpu.pipeline_mode<synchronous>, transform_indices = @transform_2, window_bounds = array<i64: 277, 64>}, {pipeline_mode = #tpu.pipeline_mode<synchronous>, transform_indices = @transform_3, window_bounds = array<i64: 24, 64>}, {transform_indices = @transform_4, window_bounds = array<i64: 48, 64>}]} {
    %c0 = arith.constant 0 : index
    %c0_0 = arith.constant 0 : index
    %c0_1 = arith.constant 0 : index
    %0 = vector.load %arg1[%c0, %c0_0, %c0_1] : memref<2x24x7xf32, #tpu.memory_space<vmem>>, vector<2x24x7xf32>
    %1 = vector.extract_strided_slice %0 {offsets = [0, 23, 0], sizes = [2, 1, 7], strides = [1, 1, 1]} : vector<2x24x7xf32> to vector<2x1x7xf32>
    %2 = vector.extract_strided_slice %0 {offsets = [0, 0, 0], sizes = [2, 23, 7], strides = [1, 1, 1]} : vector<2x24x7xf32> to vector<2x23x7xf32>
    %3 = tpu.concatenate %1, %2 in 1 : vector<2x1x7xf32>, vector<2x23x7xf32> -> vector<2x24x7xf32>
    %4 = vector.extract_strided_slice %0 {offsets = [0, 1, 0], sizes = [2, 23, 7], strides = [1, 1, 1]} : vector<2x24x7xf32> to vector<2x23x7xf32>
    %5 = vector.extract_strided_slice %0 {offsets = [0, 0, 0], sizes = [2, 1, 7], strides = [1, 1, 1]} : vector<2x24x7xf32> to vector<2x1x7xf32>
    %6 = tpu.concatenate %4, %5 in 1 : vector<2x23x7xf32>, vector<2x1x7xf32> -> vector<2x24x7xf32>
    %c0_2 = arith.constant 0 : index
    %c0_3 = arith.constant 0 : index
    %7 = vector.load %arg2[%c0_2, %c0_3] : memref<48x5xi32, #tpu.memory_space<vmem>>, vector<48x5xi32>
    %8 = tpu.iota {dimensions = array<i32: 1>} : vector<48x256xi32>
    %9 = vector.extract_strided_slice %7 {offsets = [0, 0], sizes = [48, 1], strides = [1, 1]} : vector<48x5xi32> to vector<48x1xi32>
    %10 = vector.broadcast %9 : vector<48x1xi32> to vector<48x256xi32>
    %11 = arith.cmpi eq, %8, %10 : vector<48x256xi32>
    %12 = vector.extract_strided_slice %7 {offsets = [0, 1], sizes = [48, 1], strides = [1, 1]} : vector<48x5xi32> to vector<48x1xi32>
    %13 = vector.broadcast %12 : vector<48x1xi32> to vector<48x256xi32>
    %14 = arith.cmpi eq, %8, %13 : vector<48x256xi32>
    %15 = arith.ori %11, %14 : vector<48x256xi1>
    %16 = vector.extract_strided_slice %7 {offsets = [0, 2], sizes = [48, 1], strides = [1, 1]} : vector<48x5xi32> to vector<48x1xi32>
    %17 = vector.broadcast %16 : vector<48x1xi32> to vector<48x256xi32>
    %18 = arith.cmpi eq, %8, %17 : vector<48x256xi32>
    %19 = arith.ori %15, %18 : vector<48x256xi1>
    %20 = vector.extract_strided_slice %7 {offsets = [0, 3], sizes = [48, 1], strides = [1, 1]} : vector<48x5xi32> to vector<48x1xi32>
    %21 = vector.broadcast %20 : vector<48x1xi32> to vector<48x256xi32>
    %22 = arith.cmpi eq, %8, %21 : vector<48x256xi32>
    %23 = arith.ori %19, %22 : vector<48x256xi1>
    %24 = vector.extract_strided_slice %7 {offsets = [0, 4], sizes = [48, 1], strides = [1, 1]} : vector<48x5xi32> to vector<48x1xi32>
    %25 = vector.broadcast %24 : vector<48x1xi32> to vector<48x256xi32>
    %26 = arith.cmpi eq, %8, %25 : vector<48x256xi32>
    %27 = arith.ori %23, %26 : vector<48x256xi1>
    %28 = vector.shape_cast %3 : vector<2x24x7xf32> to vector<48x7xf32>
    %29 = arith.truncf %28 : vector<48x7xf32> to vector<48x7xbf16>
    %30 = vector.shape_cast %0 : vector<2x24x7xf32> to vector<48x7xf32>
    %31 = arith.truncf %30 : vector<48x7xf32> to vector<48x7xbf16>
    %32 = vector.shape_cast %6 : vector<2x24x7xf32> to vector<48x7xf32>
    %33 = arith.truncf %32 : vector<48x7xf32> to vector<48x7xbf16>
    %34 = arith.extui %27 : vector<48x256xi1> to vector<48x256xi32>
    %35 = arith.sitofp %34 : vector<48x256xi32> to vector<48x256xf32>
    %36 = arith.truncf %35 : vector<48x256xf32> to vector<48x256xbf16>
    %37 = tpu.concatenate %29, %31, %33, %36 in 1 : vector<48x7xbf16>, vector<48x7xbf16>, vector<48x7xbf16>, vector<48x256xbf16> -> vector<48x277xbf16>
    %c0_4 = arith.constant 0 : index
    %c0_5 = arith.constant 0 : index
    %38 = vector.load %arg3[%c0_4, %c0_5] : memref<277x64xbf16, #tpu.memory_space<vmem>>, vector<277x64xbf16>
    %cst = arith.constant dense<0.000000e+00> : vector<48x64xf32>
    %39 = tpu.matmul %37, %38, %cst {dimension_numbers = #tpu.dot_dimension_numbers<[1], [0], [0], [1], [0, 0, 1, 1], [], []>} : vector<48x277xbf16>, vector<277x64xbf16>, vector<48x64xf32> -> vector<48x64xf32>
    %c0_6 = arith.constant 0 : index
    %c0_7 = arith.constant 0 : index
    %40 = vector.load %arg4[%c0_6, %c0_7] : memref<24x64xf32, #tpu.memory_space<vmem>>, vector<24x64xf32>
    %41 = vector.shape_cast %40 : vector<24x64xf32> to vector<1x24x64xf32>
    %42 = vector.shape_cast %41 : vector<1x24x64xf32> to vector<1x24x64xf32>
    %43 = vector.broadcast %42 : vector<1x24x64xf32> to vector<2x24x64xf32>
    %44 = vector.shape_cast %43 : vector<2x24x64xf32> to vector<48x64xf32>
    %45 = arith.addf %39, %44 : vector<48x64xf32>
    %c0_8 = arith.constant 0 : index
    %c0_9 = arith.constant 0 : index
    %46 = vector.load %arg5[%c0_8, %c0_9] : memref<48x64xf32, #tpu.memory_space<vmem>>, vector<48x64xf32>
    tpu.vector_store %arg5[%c0_8, %c0_9], %45 {strides = array<i32>} : memref<48x64xf32, #tpu.memory_space<vmem>>, vector<48x64xf32>,
    return
  }
  func.func @transform_0(%arg0: i32) -> (i32, i32, i32) {
    %c0_i32 = arith.constant 0 : i32
    %c0_i32_0 = arith.constant 0 : i32
    %c0_i32_1 = arith.constant 0 : i32
    return %arg0, %c0_i32, %c0_i32_0 : i32, i32, i32
  }
  func.func @transform_1(%arg0: i32) -> (i32, i32) {
    %c0_i32 = arith.constant 0 : i32
    %c0_i32_0 = arith.constant 0 : i32
    return %arg0, %c0_i32 : i32, i32
  }
  func.func @transform_2(%arg0: i32) -> (i32, i32) {
    %c0_i32 = arith.constant 0 : i32
    %c0_i32_0 = arith.constant 0 : i32
    %c0_i32_1 = arith.constant 0 : i32
    return %c0_i32, %c0_i32_0 : i32, i32
  }
  func.func @transform_3(%arg0: i32) -> (i32, i32) {
    %c0_i32 = arith.constant 0 : i32
    %c0_i32_0 = arith.constant 0 : i32
    %c0_i32_1 = arith.constant 0 : i32
    return %c0_i32, %c0_i32_0 : i32, i32
  }
  func.func @transform_4(%arg0: i32) -> (i32, i32) {
    %c0_i32 = arith.constant 0 : i32
    %c0_i32_0 = arith.constant 0 : i32
    return %arg0, %c0_i32 : i32, i32
  }
}

</mosaic_0001>

<llo_original>
// kernel: _data_embedding_forward.1
$region0: #{_data_embedding_forward.1}
  #allocation0 [shape = 'u32[]', space=smem, size = 0x4, offset = 0x4, fixed_abs, tag = 'smem constant byte address 0x4 - core index']
  #allocation1 [shape = 'u32[72,128]{1,0:T(1,128)}', space=vmem, size = 0x9000, scoped, tag = 'internal scratch']
  %s0 = inlined_call_operand.vmem [shape: f32[2,24,7], index: 0, kind: input, shape index: {}]
  %s1 = inlined_call_operand.vmem [shape: s32[48,5], index: 1, kind: input, shape index: {}]
  %s2 = inlined_call_operand.vmem [shape: bf16[277,64], index: 2, kind: input, shape index: {}]
  %s3 = inlined_call_operand.vmem [shape: f32[24,64], index: 3, kind: input, shape index: {}]
  %s4 = inlined_call_operand.hbm [shape: f32[48,64], index: 4, kind: output, shape index: {}]
  %s5 = sld [smem:[#allocation0]]
  $region26: #{_data_embedding_forward.1} parent=0
    _
  %s7 = ssub.s32 1, %s5
  %s8 = scalar_select 0, %s7, %s5
  $region1: #{_data_embedding_forward.1} parent=0
    #allocation2 [shape = 'u8[24576]{0}', space=vmem, size = 0x6000, scoped, tag = 'output window, operand 0, single buffered']
    #allocation3 [shape = 's32[1]{0}', space=sflag, size = 0x4, scoped, tag = 'scoped memory for _data_embedding_forward.1']
    %9 = vsyncpa [#allocation3], 0
    // Predicated region
    $region2: #{_data_embedding_forward.1} parent=1 // pred_check
      _
    $region3: #{_data_embedding_forward.1} parent=1 // pred_check_branch
      %11 = sbr.rel (0) target = $region5
    $region4: #{_data_embedding_forward.1} parent=1 // pred_region
      _
    $region5: #{_data_embedding_forward.1} parent=1 // pred_fallthru
      _
    // Predicated region
    $region6: #{_data_embedding_forward.1} parent=1 // pred_check
      _
    $region7: #{_data_embedding_forward.1} parent=1 // pred_check_branch
      %13 = sbr.rel (0) target = $region9
    $region8: #{_data_embedding_forward.1} parent=1 // pred_region
      _
    $region9: #{_data_embedding_forward.1} parent=1 // pred_fallthru
      _
    // Predicated region
    $region10: #{_data_embedding_forward.1} parent=1 // pred_check
      _
    $region11: #{_data_embedding_forward.1} parent=1 // pred_check_branch
      %15 = sbr.rel (0) target = $region13
    $region12: #{_data_embedding_forward.1} parent=1 // pred_region
      _
    $region13: #{_data_embedding_forward.1} parent=1 // pred_fallthru
      _
    // Predicated region
    $region14: #{_data_embedding_forward.1} parent=1 // pred_check
      _
    $region15: #{_data_embedding_forward.1} parent=1 // pred_check_branch
      %17 = sbr.rel (0) target = $region17
    $region16: #{_data_embedding_forward.1} parent=1 // pred_region
      _
    $region17: #{_data_embedding_forward.1} parent=1 // pred_fallthru
      _
    %v19 = vld [vmem:[%s0] sm:$0xff]
    %v20 = vld [vmem:[%s0 + $0x8] sm:$0xff]
    %v21 = vld [vmem:[%s0 + $0x10] sm:$0xff]
    %v22 = vld [vmem:[%s0 + $0x18] sm:$0xff]
    %v23 = vld [vmem:[%s0 + $0x20] sm:$0xff]
    %v24 = vld [vmem:[%s0 + $0x28] sm:$0xff]
    %v27 = vrot.slane %v21, 7
    %v28 = vrot.slane %v24, 7
    %vm35 = vcmask 1040384
    %v36 = vrot.slane %v19, 7
    %v37 = vrot.slane %v20, 7
    %v38 = vsel %vm35, %v36, %v37
    %v39 = vsel %vm35, %v37, %v27
    %v40 = vrot.slane %v22, 7
    %v41 = vrot.slane %v23, 7
    %v42 = vsel %vm35, %v40, %v41
    %v43 = vsel %vm35, %v41, %v28
    %v50 = vsel %vm35, %v27, %v36
    %v51 = vsel %vm35, %v28, %v40
    %vm52 = vcmask 1046528
    %v53 = vrot.slane %v19, 1
    %v54 = vrot.slane %v20, 1
    %v55 = vsel %vm52, %v53, %v54
    %v56 = vrot.slane %v21, 1
    %v57 = vsel %vm52, %v54, %v56
    %v58 = vrot.slane %v22, 1
    %v59 = vrot.slane %v23, 1
    %v60 = vsel %vm52, %v58, %v59
    %v61 = vrot.slane %v24, 1
    %v62 = vsel %vm52, %v59, %v61
    %v71 = vsel %vm52, %v56, %v53
    %v72 = vsel %vm52, %v61, %v58
    %v73 = vld [vmem:[%s1] sm:$0xff]
    %v74 = vld [vmem:[%s1 + $0x8] sm:$0xff]
    %v75 = vld [vmem:[%s1 + $0x10] sm:$0xff]
    %v76 = vld [vmem:[%s1 + $0x18] sm:$0xff]
    %v77 = vld [vmem:[%s1 + $0x20] sm:$0xff]
    %v78 = vld [vmem:[%s1 + $0x28] sm:$0xff]
    %v79 = vlaneseq
    %v80 = vand.u32 %v79, 127
    %v81 = vadd.s32 %v80, 128
    %82 = vset.pattern.permute.xlu0 0
    %83 = vperm.xlu0 %82, %v73
    %v84 = vpop.permute.xlu0 %83
    %85 = vset.pattern.permute.xlu0 0
    %86 = vperm.xlu0 %85, %v74
    %v87 = vpop.permute.xlu0 %86
    %88 = vset.pattern.permute.xlu0 0
    %89 = vperm.xlu0 %88, %v75
    %v90 = vpop.permute.xlu0 %89
    %91 = vset.pattern.permute.xlu0 0
    %92 = vperm.xlu0 %91, %v76
    %v93 = vpop.permute.xlu0 %92
    %94 = vset.pattern.permute.xlu0 0
    %95 = vperm.xlu0 %94, %v77
    %v96 = vpop.permute.xlu0 %95
    %97 = vset.pattern.permute.xlu0 0
    %98 = vperm.xlu0 %97, %v78
    %v99 = vpop.permute.xlu0 %98
    %vm100 = vcmp.eq.s32.totalorder %v80, %v84
    %vm101 = vcmp.eq.s32.totalorder %v81, %v84
    %vm102 = vcmp.eq.s32.totalorder %v80, %v87
    %vm103 = vcmp.eq.s32.totalorder %v81, %v87
    %vm104 = vcmp.eq.s32.totalorder %v80, %v90
    %vm105 = vcmp.eq.s32.totalorder %v81, %v90
    %vm106 = vcmp.eq.s32.totalorder %v80, %v93
    %vm107 = vcmp.eq.s32.totalorder %v81, %v93
    %vm108 = vcmp.eq.s32.totalorder %v80, %v96
    %vm109 = vcmp.eq.s32.totalorder %v81, %v96
    %vm110 = vcmp.eq.s32.totalorder %v80, %v99
    %vm111 = vcmp.eq.s32.totalorder %v81, %v99
    %112 = vset.pattern.permute.xlu0 1
    %113 = vperm.xlu0 %112, %v73
    %v114 = vpop.permute.xlu0 %113
    %115 = vset.pattern.permute.xlu0 1
    %116 = vperm.xlu0 %115, %v74
    %v117 = vpop.permute.xlu0 %116
    %118 = vset.pattern.permute.xlu0 1
    %119 = vperm.xlu0 %118, %v75
    %v120 = vpop.permute.xlu0 %119
    %121 = vset.pattern.permute.xlu0 1
    %122 = vperm.xlu0 %121, %v76
    %v123 = vpop.permute.xlu0 %122
    %124 = vset.pattern.permute.xlu0 1
    %125 = vperm.xlu0 %124, %v77
    %v126 = vpop.permute.xlu0 %125
    %127 = vset.pattern.permute.xlu0 1
    %128 = vperm.xlu0 %127, %v78
    %v129 = vpop.permute.xlu0 %128
    %vm130 = vcmp.eq.s32.totalorder %v80, %v114
    %vm131 = vcmp.eq.s32.totalorder %v81, %v114
    %vm132 = vcmp.eq.s32.totalorder %v80, %v117
    %vm133 = vcmp.eq.s32.totalorder %v81, %v117
    %vm134 = vcmp.eq.s32.totalorder %v80, %v120
    %vm135 = vcmp.eq.s32.totalorder %v81, %v120
    %vm136 = vcmp.eq.s32.totalorder %v80, %v123
    %vm137 = vcmp.eq.s32.totalorder %v81, %v123
    %vm138 = vcmp.eq.s32.totalorder %v80, %v126
    %vm139 = vcmp.eq.s32.totalorder %v81, %v126
    %vm140 = vcmp.eq.s32.totalorder %v80, %v129
    %vm141 = vcmp.eq.s32.totalorder %v81, %v129
    %vm142 = vmor %vm100, %vm130
    %vm143 = vmor %vm101, %vm131
    %vm144 = vmor %vm102, %vm132
    %vm145 = vmor %vm103, %vm133
    %vm146 = vmor %vm104, %vm134
    %vm147 = vmor %vm105, %vm135
    %vm148 = vmor %vm106, %vm136
    %vm149 = vmor %vm107, %vm137
    %vm150 = vmor %vm108, %vm138
    %vm151 = vmor %vm109, %vm139
    %vm152 = vmor %vm110, %vm140
    %vm153 = vmor %vm111, %vm141
    %154 = vset.pattern.permute.xlu0 2
    %155 = vperm.xlu0 %154, %v73
    %v156 = vpop.permute.xlu0 %155
    %157 = vset.pattern.permute.xlu0 2
    %158 = vperm.xlu0 %157, %v74
    %v159 = vpop.permute.xlu0 %158
    %160 = vset.pattern.permute.xlu0 2
    %161 = vperm.xlu0 %160, %v75
    %v162 = vpop.permute.xlu0 %161
    %163 = vset.pattern.permute.xlu0 2
    %164 = vperm.xlu0 %163, %v76
    %v165 = vpop.permute.xlu0 %164
    %166 = vset.pattern.permute.xlu0 2
    %167 = vperm.xlu0 %166, %v77
    %v168 = vpop.permute.xlu0 %167
    %169 = vset.pattern.permute.xlu0 2
    %170 = vperm.xlu0 %169, %v78
    %v171 = vpop.permute.xlu0 %170
    %vm172 = vcmp.eq.s32.totalorder %v80, %v156
    %vm173 = vcmp.eq.s32.totalorder %v81, %v156
    %vm174 = vcmp.eq.s32.totalorder %v80, %v159
    %vm175 = vcmp.eq.s32.totalorder %v81, %v159
    %vm176 = vcmp.eq.s32.totalorder %v80, %v162
    %vm177 = vcmp.eq.s32.totalorder %v81, %v162
    %vm178 = vcmp.eq.s32.totalorder %v80, %v165
    %vm179 = vcmp.eq.s32.totalorder %v81, %v165
    %vm180 = vcmp.eq.s32.totalorder %v80, %v168
    %vm181 = vcmp.eq.s32.totalorder %v81, %v168
    %vm182 = vcmp.eq.s32.totalorder %v80, %v171
    %vm183 = vcmp.eq.s32.totalorder %v81, %v171
    %vm184 = vmor %vm142, %vm172
    %vm185 = vmor %vm143, %vm173
    %vm186 = vmor %vm144, %vm174
    %vm187 = vmor %vm145, %vm175
    %vm188 = vmor %vm146, %vm176
    %vm189 = vmor %vm147, %vm177
    %vm190 = vmor %vm148, %vm178
    %vm191 = vmor %vm149, %vm179
    %vm192 = vmor %vm150, %vm180
    %vm193 = vmor %vm151, %vm181
    %vm194 = vmor %vm152, %vm182
    %vm195 = vmor %vm153, %vm183
    %196 = vset.pattern.permute.xlu0 3
    %197 = vperm.xlu0 %196, %v73
    %v198 = vpop.permute.xlu0 %197
    %199 = vset.pattern.permute.xlu0 3
    %200 = vperm.xlu0 %199, %v74
    %v201 = vpop.permute.xlu0 %200
    %202 = vset.pattern.permute.xlu0 3
    %203 = vperm.xlu0 %202, %v75
    %v204 = vpop.permute.xlu0 %203
    %205 = vset.pattern.permute.xlu0 3
    %206 = vperm.xlu0 %205, %v76
    %v207 = vpop.permute.xlu0 %206
    %208 = vset.pattern.permute.xlu0 3
    %209 = vperm.xlu0 %208, %v77
    %v210 = vpop.permute.xlu0 %209
    %211 = vset.pattern.permute.xlu0 3
    %212 = vperm.xlu0 %211, %v78
    %v213 = vpop.permute.xlu0 %212
    %vm214 = vcmp.eq.s32.totalorder %v80, %v198
    %vm215 = vcmp.eq.s32.totalorder %v81, %v198
    %vm216 = vcmp.eq.s32.totalorder %v80, %v201
    %vm217 = vcmp.eq.s32.totalorder %v81, %v201
    %vm218 = vcmp.eq.s32.totalorder %v80, %v204
    %vm219 = vcmp.eq.s32.totalorder %v81, %v204
    %vm220 = vcmp.eq.s32.totalorder %v80, %v207
    %vm221 = vcmp.eq.s32.totalorder %v81, %v207
    %vm222 = vcmp.eq.s32.totalorder %v80, %v210
    %vm223 = vcmp.eq.s32.totalorder %v81, %v210
    %vm224 = vcmp.eq.s32.totalorder %v80, %v213
    %vm225 = vcmp.eq.s32.totalorder %v81, %v213
    %vm226 = vmor %vm184, %vm214
    %vm227 = vmor %vm185, %vm215
    %vm228 = vmor %vm186, %vm216
    %vm229 = vmor %vm187, %vm217
    %vm230 = vmor %vm188, %vm218
    %vm231 = vmor %vm189, %vm219
    %vm232 = vmor %vm190, %vm220
    %vm233 = vmor %vm191, %vm221
    %vm234 = vmor %vm192, %vm222
    %vm235 = vmor %vm193, %vm223
    %vm236 = vmor %vm194, %vm224
    %vm237 = vmor %vm195, %vm225
    %238 = vset.pattern.permute.xlu0 4
    %239 = vperm.xlu0 %238, %v73
    %v240 = vpop.permute.xlu0 %239
    %241 = vset.pattern.permute.xlu0 4
    %242 = vperm.xlu0 %241, %v74
    %v243 = vpop.permute.xlu0 %242
    %244 = vset.pattern.permute.xlu0 4
    %245 = vperm.xlu0 %244, %v75
    %v246 = vpop.permute.xlu0 %245
    %247 = vset.pattern.permute.xlu0 4
    %248 = vperm.xlu0 %247, %v76
    %v249 = vpop.permute.xlu0 %248
    %250 = vset.pattern.permute.xlu0 4
    %251 = vperm.xlu0 %250, %v77
    %v252 = vpop.permute.xlu0 %251
    %253 = vset.pattern.permute.xlu0 4
    %254 = vperm.xlu0 %253, %v78
    %v255 = vpop.permute.xlu0 %254
    %vm256 = vcmp.eq.s32.totalorder %v80, %v240
    %vm257 = vcmp.eq.s32.totalorder %v81, %v240
    %vm258 = vcmp.eq.s32.totalorder %v80, %v243
    %vm259 = vcmp.eq.s32.totalorder %v81, %v243
    %vm260 = vcmp.eq.s32.totalorder %v80, %v246
    %vm261 = vcmp.eq.s32.totalorder %v81, %v246
    %vm262 = vcmp.eq.s32.totalorder %v80, %v249
    %vm263 = vcmp.eq.s32.totalorder %v81, %v249
    %vm264 = vcmp.eq.s32.totalorder %v80, %v252
    %vm265 = vcmp.eq.s32.totalorder %v81, %v252
    %vm266 = vcmp.eq.s32.totalorder %v80, %v255
    %vm267 = vcmp.eq.s32.totalorder %v81, %v255
    %vm268 = vmor %vm226, %vm256
    %vm269 = vmor %vm227, %vm257
    %vm270 = vmor %vm228, %vm258
    %vm271 = vmor %vm229, %vm259
    %vm272 = vmor %vm230, %vm260
    %vm273 = vmor %vm231, %vm261
    %vm274 = vmor %vm232, %vm262
    %vm275 = vmor %vm233, %vm263
    %vm276 = vmor %vm234, %vm264
    %vm277 = vmor %vm235, %vm265
    %vm278 = vmor %vm236, %vm266
    %vm279 = vmor %vm237, %vm267
    %v280 = vpack.c.bf16 %v50, %v50
    %v281 = vpack.c.bf16 %v38, %v38
    %v282 = vpack.c.bf16 %v39, %v39
    %v283 = vpack.c.bf16 %v51, %v51
    %v284 = vpack.c.bf16 %v42, %v42
    %v285 = vpack.c.bf16 %v43, %v43
    %v286 = vpack.c.bf16 %v19, %v19
    %v287 = vpack.c.bf16 %v20, %v20
    %v288 = vpack.c.bf16 %v21, %v21
    %v289 = vpack.c.bf16 %v22, %v22
    %v290 = vpack.c.bf16 %v23, %v23
    %v291 = vpack.c.bf16 %v24, %v24
    %v292 = vpack.c.bf16 %v55, %v55
    %v293 = vpack.c.bf16 %v57, %v57
    %v294 = vpack.c.bf16 %v71, %v71
    %v295 = vpack.c.bf16 %v60, %v60
    %v296 = vpack.c.bf16 %v62, %v62
    %v297 = vpack.c.bf16 %v72, %v72
    %v298 = vsel %vm268, 1, 0
    %v299 = vsel %vm269, 1, 0
    %v300 = vsel %vm270, 1, 0
    %v301 = vsel %vm271, 1, 0
    %v302 = vsel %vm272, 1, 0
    %v303 = vsel %vm273, 1, 0
    %v304 = vsel %vm274, 1, 0
    %v305 = vsel %vm275, 1, 0
    %v306 = vsel %vm276, 1, 0
    %v307 = vsel %vm277, 1, 0
    %v308 = vsel %vm278, 1, 0
    %v309 = vsel %vm279, 1, 0
    %v310 = vcvt.s32.f32 %v298
    %v311 = vcvt.s32.f32 %v299
    %v312 = vcvt.s32.f32 %v300
    %v313 = vcvt.s32.f32 %v301
    %v314 = vcvt.s32.f32 %v302
    %v315 = vcvt.s32.f32 %v303
    %v316 = vcvt.s32.f32 %v304
    %v317 = vcvt.s32.f32 %v305
    %v318 = vcvt.s32.f32 %v306
    %v319 = vcvt.s32.f32 %v307
    %v320 = vcvt.s32.f32 %v308
    %v321 = vcvt.s32.f32 %v309
    %v322 = vpack.c.bf16 %v311, %v310
    %v323 = vpack.c.bf16 %v313, %v312
    %v324 = vpack.c.bf16 %v315, %v314
    %v325 = vpack.c.bf16 %v317, %v316
    %v326 = vpack.c.bf16 %v319, %v318
    %v327 = vpack.c.bf16 %v321, %v320
    %v334 = vunpack.c.l.b16 %v280
    %v335 = vunpack.c.l.b16 %v281
    %v336 = vunpack.c.l.b16 %v282
    %v337 = vunpack.c.l.b16 %v283
    %v338 = vunpack.c.l.b16 %v284
    %v339 = vunpack.c.l.b16 %v285
    %v340 = vpack.c.b16 %v335, %v334
    %v341 = vpack.c.b16 %v337, %v336
    %v342 = vpack.c.b16 %v339, %v338
    %v349 = vunpack.c.l.b16 %v286
    %v350 = vunpack.c.l.b16 %v287
    %v351 = vunpack.c.l.b16 %v288
    %v352 = vunpack.c.l.b16 %v289
    %v353 = vunpack.c.l.b16 %v290
    %v354 = vunpack.c.l.b16 %v291
    %v355 = vpack.c.b16 %v350, %v349
    %v356 = vpack.c.b16 %v352, %v351
    %v357 = vpack.c.b16 %v354, %v353
    %358 = vrot.lane.b32.xlu0 %v355, 7
    %v359 = vpop.permute.xlu0 %358
    %360 = vrot.lane.b32.xlu0 %v356, 7
    %v361 = vpop.permute.xlu0 %360
    %362 = vrot.lane.b32.xlu0 %v357, 7
    %v363 = vpop.permute.xlu0 %362
    %v370 = vunpack.c.l.b16 %v292
    %v371 = vunpack.c.l.b16 %v293
    %v372 = vunpack.c.l.b16 %v294
    %v373 = vunpack.c.l.b16 %v295
    %v374 = vunpack.c.l.b16 %v296
    %v375 = vunpack.c.l.b16 %v297
    %v376 = vpack.c.b16 %v371, %v370
    %v377 = vpack.c.b16 %v373, %v372
    %v378 = vpack.c.b16 %v375, %v374
    %379 = vrot.lane.b32.xlu0 %v376, 14
    %v380 = vpop.permute.xlu0 %379
    %381 = vrot.lane.b32.xlu0 %v377, 14
    %v382 = vpop.permute.xlu0 %381
    %383 = vrot.lane.b32.xlu0 %v378, 14
    %v384 = vpop.permute.xlu0 %383
    %v391 = vunpack.c.l.b16 %v322
    %v392 = vunpack.c.h.b16 %v322
    %v393 = vunpack.c.l.b16 %v323
    %v394 = vunpack.c.h.b16 %v323
    %v395 = vunpack.c.l.b16 %v324
    %v396 = vunpack.c.h.b16 %v324
    %v397 = vunpack.c.l.b16 %v325
    %v398 = vunpack.c.h.b16 %v325
    %v399 = vunpack.c.l.b16 %v326
    %v400 = vunpack.c.h.b16 %v326
    %v401 = vunpack.c.l.b16 %v327
    %v402 = vunpack.c.h.b16 %v327
    %v403 = vpack.c.b16 %v393, %v391
    %v404 = vpack.c.b16 %v394, %v392
    %v405 = vpack.c.b16 %v397, %v395
    %v406 = vpack.c.b16 %v398, %v396
    %v407 = vpack.c.b16 %v401, %v399
    %v408 = vpack.c.b16 %v402, %v400
    %409 = vrot.lane.b32.xlu0 %v403, 21
    %v410 = vpop.permute.xlu0 %409
    %411 = vrot.lane.b32.xlu0 %v404, 21
    %v412 = vpop.permute.xlu0 %411
    %413 = vrot.lane.b32.xlu0 %v405, 21
    %v414 = vpop.permute.xlu0 %413
    %415 = vrot.lane.b32.xlu0 %v406, 21
    %v416 = vpop.permute.xlu0 %415
    %417 = vrot.lane.b32.xlu0 %v407, 21
    %v418 = vpop.permute.xlu0 %417
    %419 = vrot.lane.b32.xlu0 %v408, 21
    %v420 = vpop.permute.xlu0 %419
    %vm421 = vcmask 171008
    %v422 = vsel %vm421, %v410, %v412
    %v423 = vsel %vm421, %v414, %v416
    %v424 = vsel %vm421, %v418, %v420
    %vm428 = vcmask 56320
    %v431 = vsel %vm428, %v340, %v359
    %v434 = vsel %vm428, %v341, %v361
    %v437 = vsel %vm428, %v342, %v363
    %vm438 = vcmask 113664
    %v440 = vsel %vm438, %v431, %v380
    %v442 = vsel %vm438, %v434, %v382
    %v444 = vsel %vm438, %v437, %v384
    %vm445 = vcmask 171008
    %v447 = vsel %vm445, %v440, %v410
    %v450 = vsel %vm445, %v442, %v414
    %v453 = vsel %vm445, %v444, %v418
    %v455 = vld [vmem:[%s2] sm:$0xf]
    %v456 = vld [vmem:[%s2 + $0x4] sm:$0xf]
    %v457 = vld [vmem:[%s2 + $0x8] sm:$0xf]
    %v458 = vld [vmem:[%s2 + $0xc] sm:$0xf]
    %v459 = vld [vmem:[%s2 + $0x10] sm:$0xf]
    %v460 = vld [vmem:[%s2 + $0x14] sm:$0xf]
    %v461 = vld [vmem:[%s2 + $0x18] sm:$0xf]
    %v462 = vld [vmem:[%s2 + $0x1c] sm:$0xf]
    %v463 = vld [vmem:[%s2 + $0x20] sm:$0xf]
    %v464 = vld [vmem:[%s2 + $0x24] sm:$0xf]
    %v465 = vld [vmem:[%s2 + $0x28] sm:$0xf]
    %v466 = vld [vmem:[%s2 + $0x2c] sm:$0xf]
    %v467 = vld [vmem:[%s2 + $0x30] sm:$0xf]
    %v468 = vld [vmem:[%s2 + $0x34] sm:$0xf]
    %v469 = vld [vmem:[%s2 + $0x38] sm:$0xf]
    %v470 = vld [vmem:[%s2 + $0x3c] sm:$0xf]
    %v471 = vld [vmem:[%s2 + $0x40] sm:$0xf]
    %v472 = vld [vmem:[%s2 + $0x44] sm:$0xf]
    %v473 = vld [vmem:[%s2 + $0x48] sm:$0xf]
    %v474 = vld [vmem:[%s2 + $0x4c] sm:$0xf]
    %v475 = vld [vmem:[%s2 + $0x50] sm:$0xf]
    %v476 = vld [vmem:[%s2 + $0x54] sm:$0xf]
    %v477 = vld [vmem:[%s2 + $0x58] sm:$0xf]
    %v478 = vld [vmem:[%s2 + $0x5c] sm:$0xf]
    %v479 = vld [vmem:[%s2 + $0x60] sm:$0xf]
    %v480 = vld [vmem:[%s2 + $0x64] sm:$0xf]
    %v481 = vld [vmem:[%s2 + $0x68] sm:$0xf]
    %v482 = vld [vmem:[%s2 + $0x6c] sm:$0xf]
    %v483 = vld [vmem:[%s2 + $0x70] sm:$0xf]
    %v484 = vld [vmem:[%s2 + $0x74] sm:$0xf]
    %v485 = vld [vmem:[%s2 + $0x78] sm:$0xf]
    %v486 = vld [vmem:[%s2 + $0x7c] sm:$0xf]
    %v487 = vld [vmem:[%s2 + $0x80] sm:$0xf]
    %v488 = vld [vmem:[%s2 + $0x84] sm:$0xf]
    %v489 = vld [vmem:[%s2 + $0x88] sm:$0x7]
    %v490 = vld [vmem:[%s3] sm:$0xff]
    %v491 = vld [vmem:[%s3 + $0x8] sm:$0xff]
    %v492 = vld [vmem:[%s3 + $0x10] sm:$0xff]
    %v528 = vunpack.c.l.b16 %v455
    %v529 = vunpack.c.l.b16 %v456
    %v530 = vunpack.c.l.b16 %v457
    %v531 = vunpack.c.l.b16 %v458
    %v532 = vunpack.c.l.b16 %v459
    %v533 = vunpack.c.l.b16 %v460
    %v534 = vunpack.c.l.b16 %v461
    %v535 = vunpack.c.l.b16 %v462
    %v536 = vunpack.c.l.b16 %v463
    %v537 = vunpack.c.l.b16 %v464
    %v538 = vunpack.c.l.b16 %v465
    %v539 = vunpack.c.l.b16 %v466
    %v540 = vunpack.c.l.b16 %v467
    %v541 = vunpack.c.l.b16 %v468
    %v542 = vunpack.c.l.b16 %v469
    %v543 = vunpack.c.l.b16 %v470
    %v544 = vunpack.c.l.b16 %v471
    %v545 = vunpack.c.l.b16 %v472
    %v546 = vunpack.c.l.b16 %v473
    %v547 = vunpack.c.l.b16 %v474
    %v548 = vunpack.c.l.b16 %v475
    %v549 = vunpack.c.l.b16 %v476
    %v550 = vunpack.c.l.b16 %v477
    %v551 = vunpack.c.l.b16 %v478
    %v552 = vunpack.c.l.b16 %v479
    %v553 = vunpack.c.l.b16 %v480
    %v554 = vunpack.c.l.b16 %v481
    %v555 = vunpack.c.l.b16 %v482
    %v556 = vunpack.c.l.b16 %v483
    %v557 = vunpack.c.l.b16 %v484
    %v558 = vunpack.c.l.b16 %v485
    %v559 = vunpack.c.l.b16 %v486
    %v560 = vunpack.c.l.b16 %v487
    %v561 = vunpack.c.l.b16 %v488
    %v562 = vunpack.c.l.b16 %v489
    %v563 = vpack.c.b16 %v529, %v528
    %v564 = vpack.c.b16 %v531, %v530
    %v565 = vpack.c.b16 %v533, %v532
    %v566 = vpack.c.b16 %v535, %v534
    %v567 = vpack.c.b16 %v537, %v536
    %v568 = vpack.c.b16 %v539, %v538
    %v569 = vpack.c.b16 %v541, %v540
    %v570 = vpack.c.b16 %v543, %v542
    %v571 = vpack.c.b16 %v545, %v544
    %v572 = vpack.c.b16 %v547, %v546
    %v573 = vpack.c.b16 %v549, %v548
    %v574 = vpack.c.b16 %v551, %v550
    %v575 = vpack.c.b16 %v553, %v552
    %v576 = vpack.c.b16 %v555, %v554
    %v577 = vpack.c.b16 %v557, %v556
    %v578 = vpack.c.b16 %v559, %v558
    %v579 = vpack.c.b16 %v561, %v560
    %v580 = vpack.c.b16 %v562, %v562
    %v599 = vsel %vm445, %v412, 0
    %v602 = vsel %vm445, %v416, 0
    %v605 = vsel %vm445, %v420, 0
    %vm607 = vcmask 1041408
    %vm608 = vcmask 1042432
    %v609 = vsel %vm607, 4294967295, 65535
    %v610 = vsel %vm608, %v609, 0
    %v612 = vand.u32 %v580, %v610
    %614 = vmatpush.bf16.msra.mxu0 %v570
    %615 = vmatpush.bf16.msra.mxu0 %v569
    %616 = vmatpush.bf16.msra.mxu0 %v568
    %617 = vmatpush.bf16.msra.mxu0 %v567
    %618 = vmatpush.bf16.msra.mxu0 %v566
    %619 = vmatpush.bf16.msra.mxu0 %v565
    %620 = vmatpush.bf16.msra.mxu0 %v564
    %621 = vmatpush.bf16.msra.mxu0 %v563
    %622 = vmatmul.bf16.gmra.mxu0 %v447
    %v623 = vpop.f32.mrf.mxu0
    %v624 = vadd.f32 %v490, %v623
    %v625 = vpop.f32.mrf.mxu0
    %v626 = vadd.f32 %v491, %v625
    %627 = vmatmul.bf16.gmra.mxu0 %v450
    %v628 = vpop.f32.mrf.mxu0
    %v629 = vadd.f32 %v492, %v628
    %v630 = vpop.f32.mrf.mxu0
    %v631 = vadd.f32 %v490, %v630
    %632 = vmatmul.bf16.gmra.mxu0 %v453
    %v633 = vpop.f32.mrf.mxu0
    %v634 = vadd.f32 %v491, %v633
    %v635 = vpop.f32.mrf.mxu0
    %v636 = vadd.f32 %v492, %v635
    %637 = vdwg.mxu0
    %638 = vmatpush.bf16.msra.mxu0 %v578
    %639 = vmatpush.bf16.msra.mxu0 %v577
    %640 = vmatpush.bf16.msra.mxu0 %v576
    %641 = vmatpush.bf16.msra.mxu0 %v575
    %642 = vmatpush.bf16.msra.mxu0 %v574
    %643 = vmatpush.bf16.msra.mxu0 %v573
    %644 = vmatpush.bf16.msra.mxu0 %v572
    %645 = vmatpush.bf16.msra.mxu0 %v571
    %646 = vmatmul.bf16.gmra.mxu0 %v422
    %v647 = vpop.f32.mrf.mxu0
    %v648 = vadd.f32 %v624, %v647
    %v649 = vpop.f32.mrf.mxu0
    %v650 = vadd.f32 %v626, %v649
    %651 = vmatmul.bf16.gmra.mxu0 %v423
    %v652 = vpop.f32.mrf.mxu0
    %v653 = vadd.f32 %v629, %v652
    %v654 = vpop.f32.mrf.mxu0
    %v655 = vadd.f32 %v631, %v654
    %656 = vmatmul.bf16.gmra.mxu0 %v424
    %v657 = vpop.f32.mrf.mxu0
    %v658 = vadd.f32 %v634, %v657
    %v659 = vpop.f32.mrf.mxu0
    %v660 = vadd.f32 %v636, %v659
    %661 = vdwg.mxu0
    %662 = vmatpush.bf16.msra.mxu0 0
    %663 = vmatpush.bf16.msra.mxu0 0
    %664 = vmatpush.bf16.msra.mxu0 0
    %665 = vmatpush.bf16.msra.mxu0 0
    %666 = vmatpush.bf16.msra.mxu0 0
    %667 = vmatpush.bf16.msra.mxu0 0
    %668 = vmatpush.bf16.msra.mxu0 %v612
    %669 = vmatpush.bf16.msra.mxu0 %v579
    %670 = vmatmul.bf16.gmra.mxu0 %v599
    %v671 = vpop.f32.mrf.mxu0
    %v672 = vadd.f32 %v648, %v671
    %v673 = vpop.f32.mrf.mxu0
    %v674 = vadd.f32 %v650, %v673
    %675 = vmatmul.bf16.gmra.mxu0 %v602
    %v676 = vpop.f32.mrf.mxu0
    %v677 = vadd.f32 %v653, %v676
    %v678 = vpop.f32.mrf.mxu0
    %v679 = vadd.f32 %v655, %v678
    %680 = vmatmul.bf16.gmra.mxu0 %v605
    %v681 = vpop.f32.mrf.mxu0
    %v682 = vadd.f32 %v658, %v681
    %v683 = vpop.f32.mrf.mxu0
    %v684 = vadd.f32 %v660, %v683
    %685 = vdwg.mxu0
    %vm686 = vcmask 523264
    %687 = vst.msk [vmem:[#allocation2] sm:$0xff] %vm686, %v672
    %688 = vst.msk [vmem:[#allocation2 + $0x8] sm:$0xff] %vm686, %v674
    %689 = vst.msk [vmem:[#allocation2 + $0x10] sm:$0xff] %vm686, %v677
    %690 = vst.msk [vmem:[#allocation2 + $0x18] sm:$0xff] %vm686, %v679
    %691 = vst.msk [vmem:[#allocation2 + $0x20] sm:$0xff] %vm686, %v682
    %692 = vst.msk [vmem:[#allocation2 + $0x28] sm:$0xff] %vm686, %v684
    // Predicated region
    $region18: #{_data_embedding_forward.1} parent=1 // pred_check
      _
    $region19: #{_data_embedding_forward.1} parent=1 // pred_check_branch
      %694 = sbr.rel (0) target = $region21
    $region20: #{_data_embedding_forward.1} parent=1 // pred_region
      %696 = vsyncadd [#allocation3], 0
      %s697 = sshll.u32 [#allocation2], 4
      %s698 = int_to_ptr.vmem [resolvable:$true] %s697
      %s699 = sshll.u32 %s4, 4
      %s700 = int_to_ptr.hbm [resolvable:$true] %s699
      %705 = dma.vmem_to_hbm [thread:$0]  %s698, 768, %s700, [#allocation3], 128, 128, 8
    $region21: #{_data_embedding_forward.1} parent=1 // pred_fallthru
      _
    // Predicated region
    $region22: #{_data_embedding_forward.1} parent=1 // pred_check
      _
    $region23: #{_data_embedding_forward.1} parent=1 // pred_check_branch
      %707 = sbr.rel (0) target = $region25
    $region24: #{_data_embedding_forward.1} parent=1 // pred_region
      %709 = dma.done [#allocation3], 768
    $region25: #{_data_embedding_forward.1} parent=1 // pred_fallthru
      _
    %710 = vsyncpa [#allocation3], 1

</llo_original>
